<compile_context>
chip_gen: v5e
topology: v5e:2x2
jax: 0.10.0
libtpu: 0.0.40
codegen_flags: <defaults>
</compile_context>

<pallas_src>
import math

import jax
import jax.numpy as jnp
from jax import lax
from jax.experimental import pallas as pl
from jax.experimental.pallas import tpu as pltpu


def _conv_stats_kernel(p_ref, w_ref, y_ref, s1_ref, s2_ref, acc_ref):
    """One (cout-tile, sample, row-tile) step: im2col matmul + partial BN stats.

    p_ref : (1, mt, K)     im2col patches, channel-last (K = 9*Cin)
    w_ref : (K, ct)        folded conv weights (tap-major rows)
    y_ref : (1, mt, ct)    conv output tile
    s1/s2 : (1, 1, 1, ct)  partial per-channel sum / sum-of-squares
    acc   : (mt, ct) f32   explicit VMEM accumulator
    """
    # Operands stay in their native dtype (bf16-native MXU); f32 accumulation is
    # requested via preferred_element_type only.
    acc_ref[...] = jnp.dot(p_ref[0], w_ref[...],
                           preferred_element_type=jnp.float32)
    acc = acc_ref[...]
    y_ref[0] = acc.astype(y_ref.dtype)
    # Partial BN statistics straight from the f32 accumulator (no mask needed:
    # every row of the im2col slab is a valid output position).
    s1_ref[0, 0] = jnp.sum(acc, axis=0, keepdims=True)
    s2_ref[0, 0] = jnp.sum(acc * acc, axis=0, keepdims=True)


def _bn_relu_kernel(y_ref, scale_ref, shift_ref, o_ref):
    """y * scale + shift followed by ReLU (scale/shift fold BN stats + affine)."""
    y = y_ref[0].astype(jnp.float32)
    o = y * scale_ref[...] + shift_ref[...]
    o_ref[0] = jnp.maximum(o, 0.0).astype(o_ref.dtype)


def _pick_block(total, target, multiple):
    """Largest divisor of `total` that is a multiple of `multiple` and <= target."""
    best = None
    cand = multiple
    while cand <= min(target, total):
        if total % cand == 0:
            best = cand
        cand += multiple
    return best if best is not None else total


def conv3x3_bn_relu(x_nchw, weight, gamma, beta, *, eps=1e-5, stride=1, groups=1,
                    block_m=None, intermediate_dtype=None):
    """Forward of OSNet Conv3x3 with bn_norm='BN' (training-mode batch stats).

    x_nchw: (N, Cin, H, W); weight: (Cout, Cin, 3, 3); gamma/beta: (Cout,).
    Returns (N, Cout, H, W).
    """
    assert stride == 1 and groups == 1, "TODO(synk): stride/groups != 1 unsupported"
    N, Cin, H, W = x_nchw.shape
    Cout = weight.shape[0]
    HW = H * W
    K = 9 * Cin

    # im2col in the wrapper: channel-last patches, tap-major along the K axis
    # (t = dy*3 + dx, Cin-contiguous per tap).
    x_nhwc = jnp.transpose(x_nchw, (0, 2, 3, 1))
    xp = jnp.pad(x_nhwc, ((0, 0), (1, 1), (1, 1), (0, 0)))
    patches = jnp.concatenate(
        [xp[:, dy:dy + H, dx:dx + W, :] for dy in range(3) for dx in range(3)],
        axis=-1).reshape(N, HW, K)
    # (Cout, Cin, 3, 3) -> (dy, dx, Cin, Cout) -> (K, Cout); matches tap order.
    wmat = jnp.transpose(weight, (2, 3, 1, 0)).reshape(K, Cout).astype(x_nchw.dtype)

    # Output-channel tile: 256 for the 2x256^2 MXU (v6e/v7x), else 128, else Cout.
    if Cout % 256 == 0:
        ct = 256
    elif Cout % 128 == 0:
        ct = 128
    else:
        ct = Cout
    n_ct = Cout // ct

    # Row tile of the flattened H*W axis (multiple of 8 sublanes).
    if block_m is None:
        block_m = _pick_block(HW, target=512, multiple=8)
    assert HW % block_m == 0 and (block_m % 8 == 0 or block_m == HW)
    n_mt = HW // block_m

    # Grid: Cout-tile outermost so the weight block index is unchanged across
    # the inner (sample, row-tile) steps and stays VMEM-resident.
    grid = (n_ct, N, n_mt)

    y_dtype = intermediate_dtype
    if y_dtype is None:
        # bf16 intermediate halves the HBM traffic of the conv writeback and of
        # pass 2 when the input is bf16; keep x's dtype otherwise for accuracy.
        y_dtype = jnp.bfloat16 if x_nchw.dtype == jnp.bfloat16 else x_nchw.dtype

    in_bytes = jnp.dtype(x_nchw.dtype).itemsize
    y_bytes = jnp.dtype(y_dtype).itemsize
    conv_flops = 2 * N * HW * K * Cout
    conv_bytes = int(N * HW * K * in_bytes + K * Cout * in_bytes
                     + N * HW * Cout * y_bytes + 2 * N * n_mt * Cout * 4)

    compiler_params = pltpu.CompilerParams(
        dimension_semantics=("parallel", "parallel", "parallel"),
        # v7x TensorCore VMEM is 64 MiB physical; leave pipelining headroom.
        vmem_limit_bytes=48 * 1024 * 1024)

    y_flat, s1, s2 = pl.pallas_call(
        _conv_stats_kernel,
        out_shape=(
            jax.ShapeDtypeStruct((N, HW, Cout), y_dtype),
            jax.ShapeDtypeStruct((N, n_mt, 1, Cout), jnp.float32),
            jax.ShapeDtypeStruct((N, n_mt, 1, Cout), jnp.float32),
        ),
        grid=grid,
        in_specs=[
            pl.BlockSpec((1, block_m, K), lambda j, n, m: (n, m, 0)),
            pl.BlockSpec((K, ct), lambda j, n, m: (0, j)),
        ],
        out_specs=(
            pl.BlockSpec((1, block_m, ct), lambda j, n, m: (n, m, j)),
            pl.BlockSpec((1, 1, 1, ct), lambda j, n, m: (n, m, 0, j)),
            pl.BlockSpec((1, 1, 1, ct), lambda j, n, m: (n, m, 0, j)),
        ),
        scratch_shapes=[pltpu.VMEM((block_m, ct), jnp.float32)],
        compiler_params=compiler_params,
        cost_estimate=pl.CostEstimate(flops=conv_flops, transcendentals=0,
                                      bytes_accessed=conv_bytes),
    )(patches, wmat)

    # Finalize training-mode BN batch statistics (biased variance, as used for
    # normalization in training) and fold the affine params into scale/shift.
    # TODO(synk): running_mean / running_var buffers are not updated here.
    count = N * HW
    mean = jnp.sum(s1, axis=(0, 1, 2)) / count
    var = jnp.sum(s2, axis=(0, 1, 2)) / count - mean * mean
    var = jnp.maximum(var, 0.0)
    scale = gamma.astype(jnp.float32) * lax.rsqrt(var + eps)
    shift = beta.astype(jnp.float32) - mean * scale
    scale2 = scale.reshape(1, Cout)
    shift2 = shift.reshape(1, Cout)

    bn_bytes = int(N * HW * Cout * (y_bytes + in_bytes) + 2 * Cout * 4)
    out_flat = pl.pallas_call(
        _bn_relu_kernel,
        out_shape=jax.ShapeDtypeStruct((N, HW, Cout), x_nchw.dtype),
        grid=grid,
        in_specs=[
            pl.BlockSpec((1, block_m, ct), lambda j, n, m: (n, m, j)),
            pl.BlockSpec((1, ct), lambda j, n, m: (0, j)),
            pl.BlockSpec((1, ct), lambda j, n, m: (0, j)),
        ],
        out_specs=pl.BlockSpec((1, block_m, ct), lambda j, n, m: (n, m, j)),
        compiler_params=compiler_params,
        cost_estimate=pl.CostEstimate(flops=2 * N * HW * Cout, transcendentals=0,
                                      bytes_accessed=bn_bytes),
    )(y_flat, scale2, shift2)

    # The BN/ReLU kernel already wrote the final unpadded (N, H*W, Cout) slab;
    # the only remaining XLA op is the NCHW transpose required to match the
    # PyTorch module's output layout (return NHWC instead if the consumer
    # tolerates channel-last).
    out = out_flat.reshape(N, H, W, Cout)
    return jnp.transpose(out, (0, 3, 1, 2))


def conv3x3_bn_relu_reference(x, weight, gamma, beta, eps=1e-5):
    """Pure-JAX reference mirroring the PyTorch forward (train-mode BN)."""
    y = lax.conv_general_dilated(x, weight, window_strides=(1, 1),
                                 padding=((1, 1), (1, 1)),
                                 dimension_numbers=("NCHW", "OIHW", "NCHW"))
    m = y.mean(axis=(0, 2, 3), keepdims=True)
    v = ((y - m) ** 2).mean(axis=(0, 2, 3), keepdims=True)
    yh = (y - m) * lax.rsqrt(v + eps)
    yh = yh * gamma.reshape(1, -1, 1, 1) + beta.reshape(1, -1, 1, 1)
    return jnp.maximum(yh, 0.0)


if __name__ == "__main__":
    key = jax.random.PRNGKey(0)
    N, Cin, Cout, H, W = 2, 4, 8, 16, 16

    k_x, k_w, k_g, k_b = jax.random.split(key, 4)
    x = jax.random.normal(k_x, (N, Cin, H, W), dtype=jnp.float32)
    w = 0.1 * jax.random.normal(k_w, (Cout, Cin, 3, 3), dtype=jnp.float32)
    # Module default init is gamma=1, beta=0; use non-trivial values to
    # exercise the affine path.
    gamma = 1.0 + 0.1 * jax.random.normal(k_g, (Cout,), dtype=jnp.float32)
    beta = 0.1 * jax.random.normal(k_b, (Cout,), dtype=jnp.float32)

    # block_m=128 exercises the row-tiled grid (n_mt=2) and the cross-tile
    # partial-stats reduction at this small demo size.
    out = conv3x3_bn_relu(x, w, gamma, beta, block_m=128)
    out = jax.block_until_ready(out)

    ref = conv3x3_bn_relu_reference(x, w, gamma, beta)
    assert out.shape == (N, Cout, H, W)
    assert jnp.allclose(out, ref, atol=1e-4, rtol=1e-4), float(
        jnp.max(jnp.abs(out - ref)))

    print("KERNEL_OK")
</pallas_src>

<mosaic_0001>
module attributes {stable_mosaic.version = 11 : i64} {
  func.func @_conv_stats_kernel(%arg0: i32, %arg1: i32, %arg2: i32, %arg3: memref<1x128x36xf32, #tpu.memory_space<vmem>>, %arg4: memref<36x8xf32, #tpu.memory_space<vmem>>, %arg5: memref<1x128x8xf32, #tpu.memory_space<vmem>>, %arg6: memref<1x1x1x8xf32, #tpu.memory_space<vmem>>, %arg7: memref<1x1x1x8xf32, #tpu.memory_space<vmem>>, %arg8: memref<128x8xf32, #tpu.memory_space<vmem>>) attributes {dimension_semantics = [#tpu.dimension_semantics<parallel>, #tpu.dimension_semantics<parallel>, #tpu.dimension_semantics<parallel>], iteration_bounds = array<i64: 1, 2, 2>, scalar_prefetch = 0 : i64, scratch_operands = 1 : i64, tpu.core_type = #tpu.core_type<tc>, window_params = [{transform_indices = @transform_0, window_bounds = array<i64: 1, 128, 36>}, {transform_indices = @transform_1, window_bounds = array<i64: 36, 8>}, {transform_indices = @transform_2, window_bounds = array<i64: 1, 128, 8>}, {transform_indices = @transform_3, window_bounds = array<i64: 1, 1, 1, 8>}, {transform_indices = @transform_4, window_bounds = array<i64: 1, 1, 1, 8>}]} {
    %c0 = arith.constant 0 : index
    %c0_0 = arith.constant 0 : index
    %c0_1 = arith.constant 0 : index
    %0 = vector.load %arg3[%c0, %c0_0, %c0_1] : memref<1x128x36xf32, #tpu.memory_space<vmem>>, vector<1x128x36xf32>
    %1 = vector.shape_cast %0 : vector<1x128x36xf32> to vector<128x36xf32>
    %c0_2 = arith.constant 0 : index
    %c0_3 = arith.constant 0 : index
    %2 = vector.load %arg4[%c0_2, %c0_3] : memref<36x8xf32, #tpu.memory_space<vmem>>, vector<36x8xf32>
    %cst = arith.constant dense<0.000000e+00> : vector<128x8xf32>
    %3 = tpu.matmul %1, %2, %cst {dimension_numbers = #tpu.dot_dimension_numbers<[1], [0], [0], [1], [0, 0, 1, 1], [], []>} : vector<128x36xf32>, vector<36x8xf32>, vector<128x8xf32> -> vector<128x8xf32>
    %c0_4 = arith.constant 0 : index
    %c0_5 = arith.constant 0 : index
    %4 = vector.load %arg8[%c0_4, %c0_5] : memref<128x8xf32, #tpu.memory_space<vmem>>, vector<128x8xf32>
    tpu.vector_store %arg8[%c0_4, %c0_5], %3 {strides = array<i32>} : memref<128x8xf32, #tpu.memory_space<vmem>>, vector<128x8xf32>,
    %c0_6 = arith.constant 0 : index
    %c0_7 = arith.constant 0 : index
    %5 = vector.load %arg8[%c0_6, %c0_7] : memref<128x8xf32, #tpu.memory_space<vmem>>, vector<128x8xf32>
    %c0_8 = arith.constant 0 : index
    %c0_9 = arith.constant 0 : index
    %c0_10 = arith.constant 0 : index
    %6 = vector.load %arg5[%c0_8, %c0_9, %c0_10] : memref<1x128x8xf32, #tpu.memory_space<vmem>>, vector<1x128x8xf32>
    %7 = vector.shape_cast %6 : vector<1x128x8xf32> to vector<128x8xf32>
    %8 = vector.shape_cast %5 : vector<128x8xf32> to vector<1x128x8xf32>
    tpu.vector_store %arg5[%c0_8, %c0_9, %c0_10], %8 {strides = array<i32>} : memref<1x128x8xf32, #tpu.memory_space<vmem>>, vector<1x128x8xf32>,
    %cst_11 = arith.constant dense<0.000000e+00> : vector<8xf32>
    %9 = vector.multi_reduction <add>, %5, %cst_11 [0] : vector<128x8xf32> to vector<8xf32>
    %10 = vector.shape_cast %9 : vector<8xf32> to vector<1x8xf32>
    %c0_12 = arith.constant 0 : index
    %c0_13 = arith.constant 0 : index
    %c0_14 = arith.constant 0 : index
    %c0_15 = arith.constant 0 : index
    %11 = vector.load %arg6[%c0_12, %c0_13, %c0_14, %c0_15] : memref<1x1x1x8xf32, #tpu.memory_space<vmem>>, vector<1x1x1x8xf32>
    %12 = vector.shape_cast %11 : vector<1x1x1x8xf32> to vector<1x8xf32>
    %13 = vector.shape_cast %10 : vector<1x8xf32> to vector<1x1x1x8xf32>
    tpu.vector_store %arg6[%c0_12, %c0_13, %c0_14, %c0_15], %13 {strides = array<i32>} : memref<1x1x1x8xf32, #tpu.memory_space<vmem>>, vector<1x1x1x8xf32>,
    %14 = arith.mulf %5, %5 : vector<128x8xf32>
    %cst_16 = arith.constant dense<0.000000e+00> : vector<8xf32>
    %15 = vector.multi_reduction <add>, %14, %cst_16 [0] : vector<128x8xf32> to vector<8xf32>
    %16 = vector.shape_cast %15 : vector<8xf32> to vector<1x8xf32>
    %c0_17 = arith.constant 0 : index
    %c0_18 = arith.constant 0 : index
    %c0_19 = arith.constant 0 : index
    %c0_20 = arith.constant 0 : index
    %17 = vector.load %arg7[%c0_17, %c0_18, %c0_19, %c0_20] : memref<1x1x1x8xf32, #tpu.memory_space<vmem>>, vector<1x1x1x8xf32>
    %18 = vector.shape_cast %17 : vector<1x1x1x8xf32> to vector<1x8xf32>
    %19 = vector.shape_cast %16 : vector<1x8xf32> to vector<1x1x1x8xf32>
    tpu.vector_store %arg7[%c0_17, %c0_18, %c0_19, %c0_20], %19 {strides = array<i32>} : memref<1x1x1x8xf32, #tpu.memory_space<vmem>>, vector<1x1x1x8xf32>,
    return
  }
  func.func @transform_0(%arg0: i32, %arg1: i32, %arg2: i32) -> (i32, i32, i32) {
    %c0_i32 = arith.constant 0 : i32
    %c0_i32_0 = arith.constant 0 : i32
    return %arg1, %arg2, %c0_i32 : i32, i32, i32
  }
  func.func @transform_1(%arg0: i32, %arg1: i32, %arg2: i32) -> (i32, i32) {
    %c0_i32 = arith.constant 0 : i32
    %c0_i32_0 = arith.constant 0 : i32
    return %c0_i32, %arg0 : i32, i32
  }
  func.func @transform_2(%arg0: i32, %arg1: i32, %arg2: i32) -> (i32, i32, i32) {
    %c0_i32 = arith.constant 0 : i32
    return %arg1, %arg2, %arg0 : i32, i32, i32
  }
  func.func @transform_3(%arg0: i32, %arg1: i32, %arg2: i32) -> (i32, i32, i32, i32) {
    %c0_i32 = arith.constant 0 : i32
    %c0_i32_0 = arith.constant 0 : i32
    return %arg1, %arg2, %c0_i32, %arg0 : i32, i32, i32, i32
  }
  func.func @transform_4(%arg0: i32, %arg1: i32, %arg2: i32) -> (i32, i32, i32, i32) {
    %c0_i32 = arith.constant 0 : i32
    %c0_i32_0 = arith.constant 0 : i32
    return %arg1, %arg2, %c0_i32, %arg0 : i32, i32, i32, i32
  }
}

</mosaic_0001>

<llo_original>
// kernel: tpu_custom_call.1
$region0: #{tpu_custom_call.1}
  #allocation0 [shape = 'u32[]', space=smem, size = 0x4, offset = 0x4, fixed_abs, tag = 'smem constant byte address 0x4 - core index']
  #allocation1 [shape = 'u32[72,128]{1,0:T(1,128)}', space=vmem, size = 0x9000, scoped, tag = 'internal scratch']
  #allocation2 [shape = 'f32[128,8]{1,0:T(8,128)}', space=vmem, size = 0x10000, scoped, tag = 'scratch operand']
  %s0 = inlined_call_operand.vmem [shape: f32[2,256,36], index: 0, kind: input, shape index: {}]
  %s1 = inlined_call_operand.vmem [shape: f32[36,8], index: 1, kind: input, shape index: {}]
  %s2 = inlined_call_operand.vmem [shape: f32[2,256,8], index: 2, kind: output, shape index: {0}]
  %s3 = inlined_call_operand.hbm [shape: f32[2,2,1,8], index: 3, kind: output, shape index: {1}]
  %s4 = inlined_call_operand.hbm [shape: f32[2,2,1,8], index: 4, kind: output, shape index: {2}]
  %5 = xla_tuple %s2, %s3, %s4
  %s6 = sld [smem:[#allocation0]]
  $region57: #{tpu_custom_call.1} parent=0
    _
  %s8 = ssub.s32 1, %s6
  %s9 = scalar_select 0, %s8, %s6
  $region1: #{tpu_custom_call.1} parent=0
    #allocation3 [shape = 'u8[1024]{0}', space=vmem, size = 0x400, scoped, tag = 'output window, operand 1']
    #allocation4 [shape = 's32[2]{0}', space=sflag, size = 0x8, scoped, tag = 'scoped memory for tpu_custom_call.1']
    #allocation5 [shape = 'u8[1024]{0}', space=vmem, size = 0x400, scoped, tag = 'output window, operand 2']
    #allocation6 [shape = 's32[2]{0}', space=sflag, size = 0x8, scoped, tag = 'scoped memory for tpu_custom_call.1']
    %10 = vsyncpa [#allocation4], 0
    %s11 = scalar_lea.sflag [#allocation4], 1
    %12 = vsyncpa %s11, 0
    %13 = vsyncpa [#allocation6], 0
    %s14 = scalar_lea.sflag [#allocation6], 1
    %15 = vsyncpa %s14, 0
    loop: start=0, step=1, limit=6
    $region2: #{tpu_custom_call.1} parent=1 // loop_pre_header
      _
    $region3: #{tpu_custom_call.1} parent=1 // loop_header
      %s17 = sphi 0, %s21
      %p18 = scmp.ge.s32.totalorder %s17, 6
      %s24 = sphi 0, %s43
      %s25 = sphi 0, %s39
      %s26 = sphi 0, %s35
      %s27 = sphi 0, %s24
      %s28 = sphi 0, %s25
      %s29 = sphi 0, %s26
      %s30 = sphi 0, %s27
      %s31 = sphi 0, %s28
      %s32 = sphi 0, %s29
      %s48 = sphi 0, %s50
      %s51 = sphi 0, %s48
      %s52 = sphi 0, %s51
      %s68 = sphi 0, %s52
      %s74 = sphi 0, %s76
      %s77 = sphi 0, %s74
      %s78 = sphi 0, %s77
      %s94 = sphi 0, %s78
      %s104 = sphi 0, %s106
      %s107 = sphi 0, %s104
      %s108 = sphi 0, %s107
      %s124 = sphi 0, %s108
      %s134 = sphi 0, %s136
      %s137 = sphi 0, %s134
      %s138 = sphi 0, %s137
      %s154 = sphi 0, %s138
      %s164 = sphi 0, %s166
      %s167 = sphi 0, %s164
      %s168 = sphi 0, %s167
      %s184 = sphi 0, %s168
    $region4: #{tpu_custom_call.1} parent=1 // loop_header_branch
      %20 = sbr.rel (%p18) target = $region8
    $region5: #{tpu_custom_call.1} parent=1 // loop_body
      %s22 = ssub.s32 %s17, 1
      %s23 = ssub.s32 %s17, 2
      %s33 = sadd.s32 1, %s26
      %p34 = scmp.ge.s32.totalorder %s33, 2
      %s35 = scalar_select %p34, 0, %s33
      %s36 = sadd.s32 1, %s25
      %s37 = scalar_select %p34, %s36, %s25
      %p38 = scmp.ge.s32.totalorder %s37, 2
      %s39 = scalar_select %p38, 0, %s37
      %s40 = sadd.s32 1, %s24
      %s41 = scalar_select %p38, %s40, %s24
      %p42 = scmp.ge.s32.totalorder %s41, 1
      %s43 = scalar_select %p42, 0, %s41
      %s44 = ssub.s32 %s25, %s39
      %s45 = ssub.s32 %s26, %s35
      %s46 = sor.u32 %s44, %s45
      %p47 = scmp.eq.s32.totalorder %s46, 0
      %s49 = sadd.s32 %s48, 1
      %s50 = scalar_select %p47, %s48, %s49
      %p53 = pneg %p47
      %p54 = scmp.eq.s32.totalorder %s17, 3
      %p55 = por %p53, %p54
      %p56 = scmp.ne.s32.totalorder %s48, %s51
      %p57 = scmp.eq.s32.totalorder %s17, 0
      %p58 = por %p56, %p57
      %p59 = scmp.ne.s32.totalorder %s48, %s51
      %p60 = scmp.eq.s32.totalorder %s22, 3
      %p61 = por %p59, %p60
      %p62 = scmp.ne.s32.totalorder %s51, %s52
      %p63 = scmp.eq.s32.totalorder %s22, 0
      %p64 = por %p62, %p63
      %p65 = scmp.ne.s32.totalorder %s51, %s52
      %p66 = scmp.eq.s32.totalorder %s23, 3
      %p67 = por %p65, %p66
      %p69 = scmp.ne.s32.totalorder %s52, %s68
      %p70 = scmp.eq.s32.totalorder %s23, 0
      %p71 = por %p69, %p70
      %s72 = ssub.s32 %s24, %s43
      %p73 = scmp.eq.s32.totalorder %s72, 0
      %s75 = sadd.s32 %s74, 1
      %s76 = scalar_select %p73, %s74, %s75
      %p79 = pneg %p73
      %p80 = scmp.eq.s32.totalorder %s17, 3
      %p81 = por %p79, %p80
      %p82 = scmp.ne.s32.totalorder %s74, %s77
      %p83 = scmp.eq.s32.totalorder %s17, 0
      %p84 = por %p82, %p83
      %p85 = scmp.ne.s32.totalorder %s74, %s77
      %p86 = scmp.eq.s32.totalorder %s22, 3
      %p87 = por %p85, %p86
      %p88 = scmp.ne.s32.totalorder %s77, %s78
      %p89 = scmp.eq.s32.totalorder %s22, 0
      %p90 = por %p88, %p89
      %p91 = scmp.ne.s32.totalorder %s77, %s78
      %p92 = scmp.eq.s32.totalorder %s23, 3
      %p93 = por %p91, %p92
      %p95 = scmp.ne.s32.totalorder %s78, %s94
      %p96 = scmp.eq.s32.totalorder %s23, 0
      %p97 = por %p95, %p96
      %s98 = ssub.s32 %s25, %s39
      %s99 = ssub.s32 %s26, %s35
      %s100 = sor.u32 %s98, %s99
      %s101 = ssub.s32 %s24, %s43
      %s102 = sor.u32 %s100, %s101
      %p103 = scmp.eq.s32.totalorder %s102, 0
      %s105 = sadd.s32 %s104, 1
      %s106 = scalar_select %p103, %s104, %s105
      %p109 = pneg %p103
      %p110 = scmp.eq.s32.totalorder %s17, 3
      %p111 = por %p109, %p110
      %p112 = scmp.ne.s32.totalorder %s104, %s107
      %p113 = scmp.eq.s32.totalorder %s17, 0
      %p114 = por %p112, %p113
      %p115 = scmp.ne.s32.totalorder %s104, %s107
      %p116 = scmp.eq.s32.totalorder %s22, 3
      %p117 = por %p115, %p116
      %p118 = scmp.ne.s32.totalorder %s107, %s108
      %p119 = scmp.eq.s32.totalorder %s22, 0
      %p120 = por %p118, %p119
      %p121 = scmp.ne.s32.totalorder %s107, %s108
      %p122 = scmp.eq.s32.totalorder %s23, 3
      %p123 = por %p121, %p122
      %p125 = scmp.ne.s32.totalorder %s108, %s124
      %p126 = scmp.eq.s32.totalorder %s23, 0
      %p127 = por %p125, %p126
      %s128 = ssub.s32 %s25, %s39
      %s129 = ssub.s32 %s26, %s35
      %s130 = sor.u32 %s128, %s129
      %s131 = ssub.s32 %s24, %s43
      %s132 = sor.u32 %s130, %s131
      %p133 = scmp.eq.s32.totalorder %s132, 0
      %s135 = sadd.s32 %s134, 1
      %s136 = scalar_select %p133, %s134, %s135
      %p139 = pneg %p133
      %p140 = scmp.eq.s32.totalorder %s17, 3
      %p141 = por %p139, %p140
      %p142 = scmp.ne.s32.totalorder %s134, %s137
      %p143 = scmp.eq.s32.totalorder %s17, 0
      %p144 = por %p142, %p143
      %p145 = scmp.ne.s32.totalorder %s134, %s137
      %p146 = scmp.eq.s32.totalorder %s22, 3
      %p147 = por %p145, %p146
      %p148 = scmp.ne.s32.totalorder %s137, %s138
      %p149 = scmp.eq.s32.totalorder %s22, 0
      %p150 = por %p148, %p149
      %p151 = scmp.ne.s32.totalorder %s137, %s138
      %p152 = scmp.eq.s32.totalorder %s23, 3
      %p153 = por %p151, %p152
      %p155 = scmp.ne.s32.totalorder %s138, %s154
      %p156 = scmp.eq.s32.totalorder %s23, 0
      %p157 = por %p155, %p156
      %s158 = ssub.s32 %s25, %s39
      %s159 = ssub.s32 %s26, %s35
      %s160 = sor.u32 %s158, %s159
      %s161 = ssub.s32 %s24, %s43
      %s162 = sor.u32 %s160, %s161
      %p163 = scmp.eq.s32.totalorder %s162, 0
      %s165 = sadd.s32 %s164, 1
      %s166 = scalar_select %p163, %s164, %s165
      %p169 = pneg %p163
      %p170 = scmp.eq.s32.totalorder %s17, 3
      %p171 = por %p169, %p170
      %p172 = scmp.ne.s32.totalorder %s164, %s167
      %p173 = scmp.eq.s32.totalorder %s17, 0
      %p174 = por %p172, %p173
      %p175 = scmp.ne.s32.totalorder %s164, %s167
      %p176 = scmp.eq.s32.totalorder %s22, 3
      %p177 = por %p175, %p176
      %p178 = scmp.ne.s32.totalorder %s167, %s168
      %p179 = scmp.eq.s32.totalorder %s22, 0
      %p180 = por %p178, %p179
      %p181 = scmp.ne.s32.totalorder %s167, %s168
      %p182 = scmp.eq.s32.totalorder %s23, 3
      %p183 = por %p181, %p182
      %p185 = scmp.ne.s32.totalorder %s168, %s184
      %p186 = scmp.eq.s32.totalorder %s23, 0
      %p187 = por %p185, %p186
      %p188 = scmp.le.s32.totalorder 1, %s17
      %p189 = scmp.lt.s32.totalorder %s17, 5
      %p190 = pnand %p188, %p189
      %p191 = pneg %p190
      // Predicated region
      $region9: #{tpu_custom_call.1} parent=5 // pred_check
        _
      $region10: #{tpu_custom_call.1} parent=5 // pred_check_branch
        %193 = sbr.rel (%p190) target = $region12
      $region11: #{tpu_custom_call.1} parent=5 // pred_region
        %s194 = ssub.s32 %s17, 1
        // Predicated region
        $region13: #{tpu_custom_call.1} parent=11 // pred_check
          %p195 = pneg %p90
        $region14: #{tpu_custom_call.1} parent=11 // pred_check_branch
          %197 = sbr.rel (%p195) target = $region16
        $region15: #{tpu_custom_call.1} parent=11 // pred_region
          %p198 = scmp.lt.s32.totalorder %s27, 0
          %s199 = scalar_select %p198, %s27, 0
          %s200 = smul.addr %s199, 8
          %s201 = scalar_lea.vmem %s1, %s200
        $region16: #{tpu_custom_call.1} parent=11 // pred_fallthru
          _
      $region12: #{tpu_custom_call.1} parent=5 // pred_fallthru
        _
      %p202 = scmp.lt.s32.totalorder %s17, 4
      // Predicated region
      $region17: #{tpu_custom_call.1} parent=5 // pred_check
        %p203 = pneg %p202
      $region18: #{tpu_custom_call.1} parent=5 // pred_check_branch
        %205 = sbr.rel (%p203) target = $region20
      $region19: #{tpu_custom_call.1} parent=5 // pred_region
        // Predicated region
        $region21: #{tpu_custom_call.1} parent=19 // pred_check
          %p206 = pneg %p58
        $region22: #{tpu_custom_call.1} parent=19 // pred_check_branch
          %208 = sbr.rel (%p206) target = $region24
        $region23: #{tpu_custom_call.1} parent=19 // pred_region
          %s209 = smul.u32 16, %s26
          %p210 = scmp.lt.s32.totalorder %s25, 1
          %s211 = scalar_select %p210, %s25, 1
          %p212 = scmp.lt.s32.totalorder %s209, 31
          %s213 = scalar_select %p212, %s209, 31
          %s214 = smul.addr %s211, 32
          %s215 = sadd.s32 %s213, %s214
          %s216 = smul.addr %s215, 8
          %s217 = scalar_lea.vmem %s0, %s216
          %s218 = smul.u32 16, %s26
        $region24: #{tpu_custom_call.1} parent=19 // pred_fallthru
          _
      $region20: #{tpu_custom_call.1} parent=5 // pred_fallthru
        _
      %p219 = scmp.le.s32.totalorder 1, %s17
      %p220 = scmp.lt.s32.totalorder %s17, 5
      %p221 = pnand %p219, %p220
      %p222 = pneg %p221
      // Predicated region
      $region25: #{tpu_custom_call.1} parent=5 // pred_check
        _
      $region26: #{tpu_custom_call.1} parent=5 // pred_check_branch
        %224 = sbr.rel (%p221) target = $region28
      $region27: #{tpu_custom_call.1} parent=5 // pred_region
        %s225 = ssub.s32 %s17, 1
        %s226 = smul.u32 16, %s29
        %p227 = scmp.lt.s32.totalorder %s28, 1
        %s228 = scalar_select %p227, %s28, 1
        %p229 = scmp.lt.s32.totalorder %s226, 31
        %s230 = scalar_select %p229, %s226, 31
        %s231 = smul.addr %s228, 32
        %s232 = sadd.s32 %s230, %s231
        %s233 = smul.addr %s232, 8
        %s234 = scalar_lea.vmem %s0, %s233
        %p235 = pneg %p64
        %p236 = pneg %p61
        %p237 = scmp.lt.s32.totalorder %s27, 0
        %s238 = scalar_select %p237, %s27, 0
        %s239 = smul.addr %s238, 8
        %s240 = scalar_lea.vmem %s1, %s239
        %p241 = pneg %p90
        %p242 = pneg %p87
        %p243 = pneg %p120
        %p244 = pneg %p117
        %s245 = smul.u32 16, %s29
        %p246 = scmp.lt.s32.totalorder %s28, 1
        %s247 = scalar_select %p246, %s28, 1
        %p248 = scmp.lt.s32.totalorder %s245, 31
        %s249 = scalar_select %p248, %s245, 31
        %p250 = scmp.lt.s32.totalorder %s27, 0
        %s251 = scalar_select %p250, %s27, 0
        %s252 = sadd.s32 %s251, %s249
        %s253 = smul.addr %s247, 32
        %s254 = sadd.s32 %s252, %s253
        %s255 = smul.addr %s254, 8
        %s256 = scalar_lea.vmem %s2, %s255
        %p257 = pneg %p150
        %p258 = pneg %p147
        %s259 = sand.u32 %s137, 1
        %s260 = scalar_lea.sflag [#allocation4], %s259
        %s261 = sand.u32 %s137, 1
        %s262 = scalar_lea.vmem [#allocation3], %s261
        %p263 = pneg %p180
        %p264 = pneg %p177
        %s265 = sand.u32 %s167, 1
        %s266 = scalar_lea.sflag [#allocation6], %s265
        %s267 = sand.u32 %s167, 1
        %s268 = scalar_lea.vmem [#allocation5], %s267
        %s269 = smul.u32 16, %s29
        %p270 = scmp.lt.s32.totalorder %s28, 1
        %s271 = scalar_select %p270, %s28, 1
        %p272 = scmp.lt.s32.totalorder %s269, 31
        %s273 = scalar_select %p272, %s269, 31
        %s274 = smul.addr %s271, 32
        %s275 = sadd.s32 %s273, %s274
        %s276 = smul.addr %s275, 8
        %s277 = scalar_lea.vmem %s0, %s276
        %s278 = smul.u32 16, %s29
        %p279 = scmp.lt.s32.totalorder %s27, 0
        %s280 = scalar_select %p279, %s27, 0
        %s281 = smul.addr %s280, 8
        %s282 = scalar_lea.vmem %s1, %s281
        %s283 = smul.u32 16, %s29
        %p284 = scmp.lt.s32.totalorder %s28, 1
        %s285 = scalar_select %p284, %s28, 1
        %p286 = scmp.lt.s32.totalorder %s283, 31
        %s287 = scalar_select %p286, %s283, 31
        %p288 = scmp.lt.s32.totalorder %s27, 0
        %s289 = scalar_select %p288, %s27, 0
        %s290 = sadd.s32 %s289, %s287
        %s291 = smul.addr %s285, 32
        %s292 = sadd.s32 %s290, %s291
        %s293 = smul.addr %s292, 8
        %s294 = scalar_lea.vmem %s2, %s293
        %s295 = smul.u32 16, %s29
        %v296 = vld [vmem:[%s277] sm:$0xff]
        %v297 = vld [vmem:[%s277 + $0x8] sm:$0xff]
        %v298 = vld [vmem:[%s277 + $0x10] sm:$0xff]
        %v299 = vld [vmem:[%s277 + $0x18] sm:$0xff]
        %v300 = vld [vmem:[%s277 + $0x20] sm:$0xff]
        %v301 = vld [vmem:[%s277 + $0x28] sm:$0xff]
        %v302 = vld [vmem:[%s277 + $0x30] sm:$0xff]
        %v303 = vld [vmem:[%s277 + $0x38] sm:$0xff]
        %v304 = vld [vmem:[%s277 + $0x40] sm:$0xff]
        %v305 = vld [vmem:[%s277 + $0x48] sm:$0xff]
        %v306 = vld [vmem:[%s277 + $0x50] sm:$0xff]
        %v307 = vld [vmem:[%s277 + $0x58] sm:$0xff]
        %v308 = vld [vmem:[%s277 + $0x60] sm:$0xff]
        %v309 = vld [vmem:[%s277 + $0x68] sm:$0xff]
        %v310 = vld [vmem:[%s277 + $0x70] sm:$0xff]
        %v311 = vld [vmem:[%s277 + $0x78] sm:$0xff]
        %v312 = vld [vmem:[%s282] sm:$0xff]
        %v313 = vld [vmem:[%s282 + $0x8] sm:$0xff]
        %v314 = vld [vmem:[%s282 + $0x10] sm:$0xff]
        %v315 = vld [vmem:[%s282 + $0x18] sm:$0xff]
        %v316 = vld [vmem:[%s282 + $0x20] sm:$0xf]
        %vm317 = vcmask 293888
        %v319 = vsel %vm317, %v296, 0
        %v322 = vsel %vm317, %v297, 0
        %v325 = vsel %vm317, %v298, 0
        %v328 = vsel %vm317, %v299, 0
        %v331 = vsel %vm317, %v300, 0
        %v334 = vsel %vm317, %v301, 0
        %v337 = vsel %vm317, %v302, 0
        %v340 = vsel %vm317, %v303, 0
        %v343 = vsel %vm317, %v304, 0
        %v346 = vsel %vm317, %v305, 0
        %v349 = vsel %vm317, %v306, 0
        %v352 = vsel %vm317, %v307, 0
        %v355 = vsel %vm317, %v308, 0
        %v358 = vsel %vm317, %v309, 0
        %v361 = vsel %vm317, %v310, 0
        %v364 = vsel %vm317, %v311, 0
        %vm366 = vcmask 1043456
        %v368 = vsel %vm366, %v316, 0
        %370 = vmatpush.msra.mxu0 0.0
        %371 = vmatpush.msra.mxu0 0.0
        %372 = vmatpush.msra.mxu0 0.0
        %373 = vmatpush.msra.mxu0 0.0
        %374 = vmatpush.msra.mxu0 0.0
        %375 = vmatpush.msra.mxu0 0.0
        %376 = vmatpush.msra.mxu0 0.0
        %377 = vmatpush.msra.mxu0 0.0
        %378 = vmatpush.msra.mxu0 0.0
        %379 = vmatpush.msra.mxu0 0.0
        %380 = vmatpush.msra.mxu0 0.0
        %381 = vmatpush.msra.mxu0 %v368
        %382 = vmatpush.msra.mxu0 %v315
        %383 = vmatpush.msra.mxu0 %v314
        %384 = vmatpush.msra.mxu0 %v313
        %385 = vmatpush.msra.mxu0 %v312
        %386 = vmatmul.f32.gmra.mxu0 %v319
        %v387 = vpop.f32.mrf.mxu0
        %v388 = vadd.f32 0.0, %v387
        %389 = vmatmul.f32.gmra.mxu0 %v322
        %v390 = vpop.f32.mrf.mxu0
        %v391 = vadd.f32 0.0, %v390
        %392 = vmatmul.f32.gmra.mxu0 %v325
        %v393 = vpop.f32.mrf.mxu0
        %v394 = vadd.f32 0.0, %v393
        %395 = vmatmul.f32.gmra.mxu0 %v328
        %v396 = vpop.f32.mrf.mxu0
        %v397 = vadd.f32 0.0, %v396
        %398 = vmatmul.f32.gmra.mxu0 %v331
        %v399 = vpop.f32.mrf.mxu0
        %v400 = vadd.f32 0.0, %v399
        %401 = vmatmul.f32.gmra.mxu0 %v334
        %v402 = vpop.f32.mrf.mxu0
        %v403 = vadd.f32 0.0, %v402
        %404 = vmatmul.f32.gmra.mxu0 %v337
        %v405 = vpop.f32.mrf.mxu0
        %v406 = vadd.f32 0.0, %v405
        %407 = vmatmul.f32.gmra.mxu0 %v340
        %v408 = vpop.f32.mrf.mxu0
        %v409 = vadd.f32 0.0, %v408
        %410 = vmatmul.f32.gmra.mxu0 %v343
        %v411 = vpop.f32.mrf.mxu0
        %v412 = vadd.f32 0.0, %v411
        %413 = vmatmul.f32.gmra.mxu0 %v346
        %v414 = vpop.f32.mrf.mxu0
        %v415 = vadd.f32 0.0, %v414
        %416 = vmatmul.f32.gmra.mxu0 %v349
        %v417 = vpop.f32.mrf.mxu0
        %v418 = vadd.f32 0.0, %v417
        %419 = vmatmul.f32.gmra.mxu0 %v352
        %v420 = vpop.f32.mrf.mxu0
        %v421 = vadd.f32 0.0, %v420
        %422 = vmatmul.f32.gmra.mxu0 %v355
        %v423 = vpop.f32.mrf.mxu0
        %v424 = vadd.f32 0.0, %v423
        %425 = vmatmul.f32.gmra.mxu0 %v358
        %v426 = vpop.f32.mrf.mxu0
        %v427 = vadd.f32 0.0, %v426
        %428 = vmatmul.f32.gmra.mxu0 %v361
        %v429 = vpop.f32.mrf.mxu0
        %v430 = vadd.f32 0.0, %v429
        %431 = vmatmul.f32.gmra.mxu0 %v364
        %v432 = vpop.f32.mrf.mxu0
        %v433 = vadd.f32 0.0, %v432
        %434 = vdwg.mxu0
        %vm435 = vcmask 64512
        %436 = vst.msk [vmem:[#allocation2] sm:$0xff] %vm435, %v388
        %437 = vst.msk [vmem:[#allocation2 + $0x8] sm:$0xff] %vm435, %v391
        %438 = vst.msk [vmem:[#allocation2 + $0x10] sm:$0xff] %vm435, %v394
        %439 = vst.msk [vmem:[#allocation2 + $0x18] sm:$0xff] %vm435, %v397
        %440 = vst.msk [vmem:[#allocation2 + $0x20] sm:$0xff] %vm435, %v400
        %441 = vst.msk [vmem:[#allocation2 + $0x28] sm:$0xff] %vm435, %v403
        %442 = vst.msk [vmem:[#allocation2 + $0x30] sm:$0xff] %vm435, %v406
        %443 = vst.msk [vmem:[#allocation2 + $0x38] sm:$0xff] %vm435, %v409
        %444 = vst.msk [vmem:[#allocation2 + $0x40] sm:$0xff] %vm435, %v412
        %445 = vst.msk [vmem:[#allocation2 + $0x48] sm:$0xff] %vm435, %v415
        %446 = vst.msk [vmem:[#allocation2 + $0x50] sm:$0xff] %vm435, %v418
        %447 = vst.msk [vmem:[#allocation2 + $0x58] sm:$0xff] %vm435, %v421
        %448 = vst.msk [vmem:[#allocation2 + $0x60] sm:$0xff] %vm435, %v424
        %449 = vst.msk [vmem:[#allocation2 + $0x68] sm:$0xff] %vm435, %v427
        %450 = vst.msk [vmem:[#allocation2 + $0x70] sm:$0xff] %vm435, %v430
        %451 = vst.msk [vmem:[#allocation2 + $0x78] sm:$0xff] %vm435, %v433
        %v452 = vld [vmem:[#allocation2] sm:$0xff]
        %v453 = vld [vmem:[#allocation2 + $0x8] sm:$0xff]
        %v454 = vld [vmem:[#allocation2 + $0x10] sm:$0xff]
        %v455 = vld [vmem:[#allocation2 + $0x18] sm:$0xff]
        %v456 = vld [vmem:[#allocation2 + $0x20] sm:$0xff]
        %v457 = vld [vmem:[#allocation2 + $0x28] sm:$0xff]
        %v458 = vld [vmem:[#allocation2 + $0x30] sm:$0xff]
        %v459 = vld [vmem:[#allocation2 + $0x38] sm:$0xff]
        %v460 = vld [vmem:[#allocation2 + $0x40] sm:$0xff]
        %v461 = vld [vmem:[#allocation2 + $0x48] sm:$0xff]
        %v462 = vld [vmem:[#allocation2 + $0x50] sm:$0xff]
        %v463 = vld [vmem:[#allocation2 + $0x58] sm:$0xff]
        %v464 = vld [vmem:[#allocation2 + $0x60] sm:$0xff]
        %v465 = vld [vmem:[#allocation2 + $0x68] sm:$0xff]
        %v466 = vld [vmem:[#allocation2 + $0x70] sm:$0xff]
        %v467 = vld [vmem:[#allocation2 + $0x78] sm:$0xff]
        %468 = vst.msk [vmem:[%s294] sm:$0xff] %vm435, %v452
        %469 = vst.msk [vmem:[%s294 + $0x8] sm:$0xff] %vm435, %v453
        %470 = vst.msk [vmem:[%s294 + $0x10] sm:$0xff] %vm435, %v454
        %471 = vst.msk [vmem:[%s294 + $0x18] sm:$0xff] %vm435, %v455
        %472 = vst.msk [vmem:[%s294 + $0x20] sm:$0xff] %vm435, %v456
        %473 = vst.msk [vmem:[%s294 + $0x28] sm:$0xff] %vm435, %v457
        %474 = vst.msk [vmem:[%s294 + $0x30] sm:$0xff] %vm435, %v458
        %475 = vst.msk [vmem:[%s294 + $0x38] sm:$0xff] %vm435, %v459
        %476 = vst.msk [vmem:[%s294 + $0x40] sm:$0xff] %vm435, %v460
        %477 = vst.msk [vmem:[%s294 + $0x48] sm:$0xff] %vm435, %v461
        %478 = vst.msk [vmem:[%s294 + $0x50] sm:$0xff] %vm435, %v462
        %479 = vst.msk [vmem:[%s294 + $0x58] sm:$0xff] %vm435, %v463
        %480 = vst.msk [vmem:[%s294 + $0x60] sm:$0xff] %vm435, %v464
        %481 = vst.msk [vmem:[%s294 + $0x68] sm:$0xff] %vm435, %v465
        %482 = vst.msk [vmem:[%s294 + $0x70] sm:$0xff] %vm435, %v466
        %483 = vst.msk [vmem:[%s294 + $0x78] sm:$0xff] %vm435, %v467
        %v484 = vsel %vm435, %v452, 0.0
        %v485 = vsel %vm435, %v453, 0.0
        %v486 = vadd.f32 %v484, %v485
        %v487 = vsel %vm435, %v454, 0.0
        %v488 = vadd.f32 %v486, %v487
        %v489 = vsel %vm435, %v455, 0.0
        %v490 = vadd.f32 %v488, %v489
        %v491 = vsel %vm435, %v456, 0.0
        %v492 = vadd.f32 %v490, %v491
        %v493 = vsel %vm435, %v457, 0.0
        %v494 = vadd.f32 %v492, %v493
        %v495 = vsel %vm435, %v458, 0.0
        %v496 = vadd.f32 %v494, %v495
        %v497 = vsel %vm435, %v459, 0.0
        %v498 = vadd.f32 %v496, %v497
        %v499 = vsel %vm435, %v460, 0.0
        %v500 = vadd.f32 %v498, %v499
        %v501 = vsel %vm435, %v461, 0.0
        %v502 = vadd.f32 %v500, %v501
        %v503 = vsel %vm435, %v462, 0.0
        %v504 = vadd.f32 %v502, %v503
        %v505 = vsel %vm435, %v463, 0.0
        %v506 = vadd.f32 %v504, %v505
        %v507 = vsel %vm435, %v464, 0.0
        %v508 = vadd.f32 %v506, %v507
        %v509 = vsel %vm435, %v465, 0.0
        %v510 = vadd.f32 %v508, %v509
        %v511 = vsel %vm435, %v466, 0.0
        %v512 = vadd.f32 %v510, %v511
        %v513 = vsel %vm435, %v467, 0.0
        %v514 = vadd.f32 %v512, %v513
        %v515 = vrot.slane %v514, 4
        %v516 = vadd.f32 %v514, %v515
        %v517 = vrot.slane %v516, 2
        %v518 = vadd.f32 %v516, %v517
        %v519 = vrot.slane %v518, 1
        %v520 = vadd.f32 %v518, %v519
        %vm521 = vcmask 57344
        %522 = vst.msk [vmem:[%s262] sm:$0x1] %vm521, %v520
        %v523 = vmul.f32 %v452, %v452
        %v524 = vmul.f32 %v453, %v453
        %v525 = vmul.f32 %v454, %v454
        %v526 = vmul.f32 %v455, %v455
        %v527 = vmul.f32 %v456, %v456
        %v528 = vmul.f32 %v457, %v457
        %v529 = vmul.f32 %v458, %v458
        %v530 = vmul.f32 %v459, %v459
        %v531 = vmul.f32 %v460, %v460
        %v532 = vmul.f32 %v461, %v461
        %v533 = vmul.f32 %v462, %v462
        %v534 = vmul.f32 %v463, %v463
        %v535 = vmul.f32 %v464, %v464
        %v536 = vmul.f32 %v465, %v465
        %v537 = vmul.f32 %v466, %v466
        %v538 = vmul.f32 %v467, %v467
        %v539 = vsel %vm435, %v523, 0.0
        %v540 = vsel %vm435, %v524, 0.0
        %v541 = vadd.f32 %v539, %v540
        %v542 = vsel %vm435, %v525, 0.0
        %v543 = vadd.f32 %v541, %v542
        %v544 = vsel %vm435, %v526, 0.0
        %v545 = vadd.f32 %v543, %v544
        %v546 = vsel %vm435, %v527, 0.0
        %v547 = vadd.f32 %v545, %v546
        %v548 = vsel %vm435, %v528, 0.0
        %v549 = vadd.f32 %v547, %v548
        %v550 = vsel %vm435, %v529, 0.0
        %v551 = vadd.f32 %v549, %v550
        %v552 = vsel %vm435, %v530, 0.0
        %v553 = vadd.f32 %v551, %v552
        %v554 = vsel %vm435, %v531, 0.0
        %v555 = vadd.f32 %v553, %v554
        %v556 = vsel %vm435, %v532, 0.0
        %v557 = vadd.f32 %v555, %v556
        %v558 = vsel %vm435, %v533, 0.0
        %v559 = vadd.f32 %v557, %v558
        %v560 = vsel %vm435, %v534, 0.0
        %v561 = vadd.f32 %v559, %v560
        %v562 = vsel %vm435, %v535, 0.0
        %v563 = vadd.f32 %v561, %v562
        %v564 = vsel %vm435, %v536, 0.0
        %v565 = vadd.f32 %v563, %v564
        %v566 = vsel %vm435, %v537, 0.0
        %v567 = vadd.f32 %v565, %v566
        %v568 = vsel %vm435, %v538, 0.0
        %v569 = vadd.f32 %v567, %v568
        %v570 = vrot.slane %v569, 4
        %v571 = vadd.f32 %v569, %v570
        %v572 = vrot.slane %v571, 2
        %v573 = vadd.f32 %v571, %v572
        %v574 = vrot.slane %v573, 1
        %v575 = vadd.f32 %v573, %v574
        %576 = vst.msk [vmem:[%s268] sm:$0x1] %vm521, %v575
        %s577 = smul.u32 16, %s29
        %p578 = scmp.lt.s32.totalorder %s28, 1
        %s579 = scalar_select %p578, %s28, 1
        %p580 = scmp.lt.s32.totalorder %s577, 31
        %s581 = scalar_select %p580, %s577, 31
        %p582 = scmp.lt.s32.totalorder %s27, 0
        %s583 = scalar_select %p582, %s27, 0
        %s584 = sadd.s32 %s583, %s581
        %s585 = smul.addr %s579, 32
        %s586 = sadd.s32 %s584, %s585
        %s587 = smul.addr %s586, 8
        %s588 = scalar_lea.vmem %s2, %s587
        %s589 = sand.u32 %s137, 1
        %s590 = scalar_lea.sflag [#allocation4], %s589
        %s591 = sand.u32 %s137, 1
        %s592 = scalar_lea.vmem [#allocation3], %s591
        %s593 = sand.u32 %s167, 1
        %s594 = scalar_lea.sflag [#allocation6], %s593
        %s595 = sand.u32 %s167, 1
        %s596 = scalar_lea.vmem [#allocation5], %s595
        // Predicated region
        $region29: #{tpu_custom_call.1} parent=27 // pred_check
          %p597 = pneg %p117
        $region30: #{tpu_custom_call.1} parent=27 // pred_check_branch
          %599 = sbr.rel (%p597) target = $region32
        $region31: #{tpu_custom_call.1} parent=27 // pred_region
          %s600 = smul.u32 16, %s29
        $region32: #{tpu_custom_call.1} parent=27 // pred_fallthru
          _
        // Predicated region
        $region33: #{tpu_custom_call.1} parent=27 // pred_check
          %p601 = pneg %p147
        $region34: #{tpu_custom_call.1} parent=27 // pred_check_branch
          %603 = sbr.rel (%p601) target = $region36
        $region35: #{tpu_custom_call.1} parent=27 // pred_region
          %605 = vsyncadd %s590, 0
          %s606 = sadd.s32 %s27, %s29
          %s607 = smul.addr %s28, 2
          %s608 = sadd.s32 %s606, %s607
          %s609 = scalar_lea.hbm %s3, %s608
          %s611 = sshll.u32 %s592, 4
          %s612 = int_to_ptr.vmem [resolvable:$true] %s611
          %s613 = sshll.u32 %s609, 4
          %s614 = int_to_ptr.hbm [resolvable:$true] %s613
          %616 = dma.vmem_to_hbm [thread:$0]  %s612, 16, %s614, %s590
        $region36: #{tpu_custom_call.1} parent=27 // pred_fallthru
          _
        // Predicated region
        $region37: #{tpu_custom_call.1} parent=27 // pred_check
          %p617 = pneg %p177
        $region38: #{tpu_custom_call.1} parent=27 // pred_check_branch
          %619 = sbr.rel (%p617) target = $region40
        $region39: #{tpu_custom_call.1} parent=27 // pred_region
          %621 = vsyncadd %s594, 0
          %s622 = sadd.s32 %s27, %s29
          %s623 = smul.addr %s28, 2
          %s624 = sadd.s32 %s622, %s623
          %s625 = scalar_lea.hbm %s4, %s624
          %s627 = sshll.u32 %s596, 4
          %s628 = int_to_ptr.vmem [resolvable:$true] %s627
          %s629 = sshll.u32 %s625, 4
          %s630 = int_to_ptr.hbm [resolvable:$true] %s629
          %632 = dma.vmem_to_hbm [thread:$0]  %s628, 16, %s630, %s594
        $region40: #{tpu_custom_call.1} parent=27 // pred_fallthru
          _
      $region28: #{tpu_custom_call.1} parent=5 // pred_fallthru
        _
      %p633 = scmp.le.s32.totalorder 2, %s17
      // Predicated region
      $region41: #{tpu_custom_call.1} parent=5 // pred_check
        %p634 = pneg %p633
      $region42: #{tpu_custom_call.1} parent=5 // pred_check_branch
        %636 = sbr.rel (%p634) target = $region44
      $region43: #{tpu_custom_call.1} parent=5 // pred_region
        %s637 = ssub.s32 %s17, 2
        // Predicated region
        $region45: #{tpu_custom_call.1} parent=43 // pred_check
          %p638 = pneg %p123
        $region46: #{tpu_custom_call.1} parent=43 // pred_check_branch
          %640 = sbr.rel (%p638) target = $region48
        $region47: #{tpu_custom_call.1} parent=43 // pred_region
          %s641 = smul.u32 16, %s32
          %p642 = scmp.lt.s32.totalorder %s31, 1
          %s643 = scalar_select %p642, %s31, 1
          %p644 = scmp.lt.s32.totalorder %s641, 31
          %s645 = scalar_select %p644, %s641, 31
          %p646 = scmp.lt.s32.totalorder %s30, 0
          %s647 = scalar_select %p646, %s30, 0
          %s648 = sadd.s32 %s647, %s645
          %s649 = smul.addr %s643, 32
          %s650 = sadd.s32 %s648, %s649
          %s651 = smul.addr %s650, 8
          %s652 = scalar_lea.vmem %s2, %s651
        $region48: #{tpu_custom_call.1} parent=43 // pred_fallthru
          _
        // Predicated region
        $region49: #{tpu_custom_call.1} parent=43 // pred_check
          %p653 = pneg %p153
        $region50: #{tpu_custom_call.1} parent=43 // pred_check_branch
          %655 = sbr.rel (%p653) target = $region52
        $region51: #{tpu_custom_call.1} parent=43 // pred_region
          %s656 = sand.u32 %s138, 1
          %s657 = scalar_lea.sflag [#allocation4], %s656
          %s658 = sand.u32 %s138, 1
          %s659 = scalar_lea.vmem [#allocation3], %s658
          %661 = dma.done %s657, 16
        $region52: #{tpu_custom_call.1} parent=43 // pred_fallthru
          _
        // Predicated region
        $region53: #{tpu_custom_call.1} parent=43 // pred_check
          %p662 = pneg %p183
        $region54: #{tpu_custom_call.1} parent=43 // pred_check_branch
          %664 = sbr.rel (%p662) target = $region56
        $region55: #{tpu_custom_call.1} parent=43 // pred_region
          %s665 = sand.u32 %s168, 1
          %s666 = scalar_lea.sflag [#allocation6], %s665
          %s667 = sand.u32 %s168, 1
          %s668 = scalar_lea.vmem [#allocation5], %s667
          %670 = dma.done %s666, 16
        $region56: #{tpu_custom_call.1} parent=43 // pred_fallthru
          _
      $region44: #{tpu_custom_call.1} parent=5 // pred_fallthru
        _
    $region6: #{tpu_custom_call.1} parent=1 // loop_footer
      %s21 = sadd.s32 1, %s17
    $region7: #{tpu_custom_call.1} parent=1 // loop_footer_branch
      %16 = sbr.rel target = $region3
    $region8: #{tpu_custom_call.1} parent=1 // loop_exit
      _
    %671 = vsyncpa [#allocation4], 1
    %s672 = scalar_lea.sflag [#allocation4], 1
    %673 = vsyncpa %s672, 1
    %674 = vsyncpa [#allocation6], 1
    %s675 = scalar_lea.sflag [#allocation6], 1
    %676 = vsyncpa %s675, 1

</llo_original>
